<compile_context>
chip_gen: v6e
topology: v6e:2x2x1
jax: 0.10.0
libtpu: 0.0.40
codegen_flags: <defaults>
</compile_context>

<pallas_src>
import functools

import jax
import jax.numpy as jnp
from jax import lax
from jax.experimental import pallas as pl
from jax.experimental.pallas import tpu as pltpu


NORM_TEMPERATURE = 50.0
NORM_EPS = 1e-12  # matches torch F.normalize default eps
_VMEM_LIMIT_BYTES = 48 * 1024 * 1024  # safe on all generations (v7x: 64 MiB physical)


def _round_up(n, m):
    return ((n + m - 1) // m) * m


def _linear_norm_kernel(x_ref, w_ref, b_ref, h_ref):
    """x_ref: (TM, D) bf16; w_ref: (D, Z) bf16; b_ref: (1, Z) f32;
    h_ref out: (TM, Z) bf16 -- temperature-scaled, row-L2-normalized features."""
    h = jnp.dot(x_ref[...], w_ref[...], preferred_element_type=jnp.float32)
    h = h + b_ref[...]
    sumsq = jnp.sum(h * h, axis=-1, keepdims=True)
    inv_norm = lax.rsqrt(jnp.maximum(sumsq, NORM_EPS * NORM_EPS))
    h_ref[...] = ((NORM_TEMPERATURE * inv_norm) * h).astype(h_ref.dtype)


def _classify_kernel(h_ref, zs_ref, o_ref):
    """h_ref: (TM, Z) bf16; zs_ref: (Z, TN) bf16; o_ref: (TM, TN) out_dtype.
    Carry-free: Z is fully resident, so both grid axes can be 'parallel'."""
    o_ref[...] = jnp.dot(h_ref[...], zs_ref[...],
                         preferred_element_type=jnp.float32).astype(o_ref.dtype)


@functools.partial(jax.jit, static_argnames=("tm", "tn", "out_dtype"))
def zero_shot_classifier_fwd(x, w_lin_t, b_lin, zs_weight, *, tm=1024, tn=512,
                             out_dtype=jnp.bfloat16):
    """x: (B, D_in); w_lin_t: (D_in, Z); b_lin: (1, Z); zs_weight: (Z, C+1).

    Returns (B, C+1) logits in `out_dtype` (bf16 by default; f32 accumulation).
    """
    B, D = x.shape
    Z = w_lin_t.shape[1]
    C1 = zs_weight.shape[1]

    # Adaptive tiles: collapse the row-tile count (zs_weight streamed once) and
    # keep tn a multiple of 128 (>=256 preferred on v6e/v7x) without
    # over-padding tiny problems.
    tm_eff = min(tm, _round_up(B, 8))
    tn_eff = min(tn, _round_up(C1, 128))
    B_pad = _round_up(B, tm_eff)
    C_pad = _round_up(C1, tn_eff)

    # Pad rows (zero rows -> finite junk, sliced off) and class columns (zero
    # columns -> exactly-zero logits, sliced off).  Cast MXU operands to bf16.
    x_p = jnp.pad(x, ((0, B_pad - B), (0, 0))).astype(jnp.bfloat16)
    w_bf = w_lin_t.astype(jnp.bfloat16)
    b_f32 = b_lin.reshape(1, Z).astype(jnp.float32)
    zs_p = jnp.pad(zs_weight, ((0, 0), (0, C_pad - C1))).astype(jnp.bfloat16)

    # ---------------- Stage 1: linear + bias + row L2-normalize ----------------
    n_row_tiles = B_pad // tm_eff
    cost1 = pl.CostEstimate(
        flops=2 * B_pad * D * Z + 4 * B_pad * Z,
        transcendentals=B_pad,
        bytes_accessed=(x_p.size * 2 + w_bf.size * 2 + b_f32.size * 4
                        + B_pad * Z * 2),
    )
    h = pl.pallas_call(
        _linear_norm_kernel,
        out_shape=jax.ShapeDtypeStruct((B_pad, Z), jnp.bfloat16),
        grid_spec=pltpu.PrefetchScalarGridSpec(
            num_scalar_prefetch=0,
            grid=(n_row_tiles,),
            in_specs=[
                pl.BlockSpec((tm_eff, D), lambda i: (i, 0)),   # x row tile
                pl.BlockSpec((D, Z), lambda i: (0, 0)),        # linear weight (resident)
                pl.BlockSpec((1, Z), lambda i: (0, 0)),        # linear bias
            ],
            out_specs=pl.BlockSpec((tm_eff, Z), lambda i: (i, 0)),
        ),
        compiler_params=pltpu.CompilerParams(
            dimension_semantics=("parallel",),
            vmem_limit_bytes=_VMEM_LIMIT_BYTES),
        cost_estimate=cost1,
    )(x_p, w_bf, b_f32)

    # ---------------- Stage 2: classification matmul (carry-free) --------------
    grid = (B_pad // tm_eff, C_pad // tn_eff)
    out_itemsize = jnp.dtype(out_dtype).itemsize
    cost2 = pl.CostEstimate(
        flops=2 * B_pad * Z * C_pad,
        transcendentals=0,
        # h fetched once per row tile; zs re-streamed once per row tile
        # (grid[0] == 1 for typical batches); output written once.
        bytes_accessed=(B_pad * Z * 2 + zs_p.size * 2 * grid[0]
                        + B_pad * C_pad * out_itemsize),
    )
    out = pl.pallas_call(
        _classify_kernel,
        out_shape=jax.ShapeDtypeStruct((B_pad, C_pad), out_dtype),
        grid_spec=pltpu.PrefetchScalarGridSpec(
            num_scalar_prefetch=0,
            grid=grid,
            in_specs=[
                pl.BlockSpec((tm_eff, Z), lambda i, j: (i, 0)),   # h row tile
                pl.BlockSpec((Z, tn_eff), lambda i, j: (0, j)),   # zs column tile
            ],
            out_specs=pl.BlockSpec((tm_eff, tn_eff), lambda i, j: (i, j)),
        ),
        compiler_params=pltpu.CompilerParams(
            dimension_semantics=("parallel", "parallel"),
            vmem_limit_bytes=_VMEM_LIMIT_BYTES),
        cost_estimate=cost2,
    )(h, zs_p)

    return out[:B, :C1]


def _reference(x, w_lin_t, b_lin, zs_weight):
    """Pure-JAX reference mirroring the kernel numerics (bf16 MXU operands,
    f32 accumulation, f32 normalization, bf16 h round-trip)."""
    h = jnp.dot(x.astype(jnp.bfloat16), w_lin_t.astype(jnp.bfloat16),
                preferred_element_type=jnp.float32) + b_lin.astype(jnp.float32)
    sumsq = jnp.sum(h * h, axis=-1, keepdims=True)
    h = (NORM_TEMPERATURE * lax.rsqrt(jnp.maximum(sumsq, NORM_EPS * NORM_EPS))) * h
    return jnp.dot(h.astype(jnp.bfloat16), zs_weight.astype(jnp.bfloat16),
                   preferred_element_type=jnp.float32)


if __name__ == "__main__":
    # Small shapes consistent with the module (B x D' features -> C+1 logits).
    B = 16            # number of RoI features
    D_IN = 64         # input_shape.channels
    ZS_DIM = 32       # zs_weight_dim
    NUM_CLASSES = 15  # -> C+1 = 16 output columns (extra background column)

    key = jax.random.PRNGKey(0)
    kx, kw, kb, kz = jax.random.split(key, 4)

    # Input features.
    x = jax.random.normal(kx, (B, D_IN), dtype=jnp.float32)

    # nn.Linear(input_size, zs_weight_dim): weight (Z, D_in), bias (Z,).
    # Pre-transpose the weight so the kernel does row-major matmuls.
    w_lin = jax.random.normal(kw, (ZS_DIM, D_IN), dtype=jnp.float32) * 0.02
    w_lin_t = w_lin.T                                   # (D_in, Z)
    b_lin = (jax.random.normal(kb, (ZS_DIM,), dtype=jnp.float32) * 0.02).reshape(1, ZS_DIM)

    # zs_weight (rand path): normal(std=0.01), shape (Z, C); concat zero column;
    # column-wise L2-normalize (F.normalize p=2 dim=0).  Init-time glue in JAX.
    zs_w = jax.random.normal(kz, (ZS_DIM, NUM_CLASSES), dtype=jnp.float32) * 0.01
    zs_w = jnp.concatenate([zs_w, jnp.zeros((ZS_DIM, 1), jnp.float32)], axis=1)
    col_norm = jnp.maximum(jnp.linalg.norm(zs_w, axis=0, keepdims=True), NORM_EPS)
    zs_w = zs_w / col_norm                              # (Z, C+1)

    out = zero_shot_classifier_fwd(x, w_lin_t, b_lin, zs_w)
    out = jax.block_until_ready(out)

    ref = _reference(x, w_lin_t, b_lin, zs_w)
    ref_bf = ref.astype(jnp.bfloat16).astype(jnp.float32)  # account for bf16 logits

    assert out.shape == (B, NUM_CLASSES + 1), out.shape
    assert jnp.allclose(out.astype(jnp.float32), ref_bf, atol=5e-2, rtol=5e-2), \
        float(jnp.max(jnp.abs(out.astype(jnp.float32) - ref_bf)))

    print("KERNEL_OK")
</pallas_src>

<mosaic_0001>
module attributes {stable_mosaic.version = 11 : i64} {
  func.func @_linear_norm_kernel(%arg0: i32, %arg1: memref<16x64xbf16, #tpu.memory_space<vmem>>, %arg2: memref<64x32xbf16, #tpu.memory_space<vmem>>, %arg3: memref<1x32xf32, #tpu.memory_space<vmem>>, %arg4: memref<16x32xbf16, #tpu.memory_space<vmem>>) attributes {dimension_semantics = [#tpu.dimension_semantics<parallel>], iteration_bounds = array<i64: 1>, scalar_prefetch = 0 : i64, scratch_operands = 0 : i64, tpu.core_type = #tpu.core_type<tc>, window_params = [{transform_indices = @transform_0, window_bounds = array<i64: 16, 64>}, {pipeline_mode = #tpu.pipeline_mode<synchronous>, transform_indices = @transform_1, window_bounds = array<i64: 64, 32>}, {pipeline_mode = #tpu.pipeline_mode<synchronous>, transform_indices = @transform_2, window_bounds = array<i64: 1, 32>}, {transform_indices = @transform_3, window_bounds = array<i64: 16, 32>}]} {
    %c0 = arith.constant 0 : index
    %c0_0 = arith.constant 0 : index
    %0 = vector.load %arg1[%c0, %c0_0] : memref<16x64xbf16, #tpu.memory_space<vmem>>, vector<16x64xbf16>
    %c0_1 = arith.constant 0 : index
    %c0_2 = arith.constant 0 : index
    %1 = vector.load %arg2[%c0_1, %c0_2] : memref<64x32xbf16, #tpu.memory_space<vmem>>, vector<64x32xbf16>
    %cst = arith.constant dense<0.000000e+00> : vector<16x32xf32>
    %2 = tpu.matmul %0, %1, %cst {dimension_numbers = #tpu.dot_dimension_numbers<[1], [0], [0], [1], [0, 0, 1, 1], [], []>} : vector<16x64xbf16>, vector<64x32xbf16>, vector<16x32xf32> -> vector<16x32xf32>
    %c0_3 = arith.constant 0 : index
    %c0_4 = arith.constant 0 : index
    %3 = vector.load %arg3[%c0_3, %c0_4] : memref<1x32xf32, #tpu.memory_space<vmem>>, vector<1x32xf32>
    %4 = vector.broadcast %3 : vector<1x32xf32> to vector<16x32xf32>
    %5 = arith.addf %2, %4 : vector<16x32xf32>
    %6 = arith.mulf %5, %5 : vector<16x32xf32>
    %cst_5 = arith.constant dense<0.000000e+00> : vector<16xf32>
    %7 = vector.multi_reduction <add>, %6, %cst_5 [1] : vector<16x32xf32> to vector<16xf32>
    %8 = vector.shape_cast %7 : vector<16xf32> to vector<16x1xf32>
    %cst_6 = arith.constant 1.000000e-24 : f32
    %9 = vector.broadcast %cst_6 : f32 to vector<16x1xf32>
    %10 = arith.maximumf %8, %9 : vector<16x1xf32>
    %11 = math.rsqrt %10 : vector<16x1xf32>
    %cst_7 = arith.constant 5.000000e+01 : f32
    %12 = vector.broadcast %cst_7 : f32 to vector<16x1xf32>
    %13 = arith.mulf %12, %11 : vector<16x1xf32>
    %14 = vector.broadcast %13 : vector<16x1xf32> to vector<16x32xf32>
    %15 = arith.mulf %14, %5 : vector<16x32xf32>
    %16 = arith.truncf %15 : vector<16x32xf32> to vector<16x32xbf16>
    %c0_8 = arith.constant 0 : index
    %c0_9 = arith.constant 0 : index
    %17 = vector.load %arg4[%c0_8, %c0_9] : memref<16x32xbf16, #tpu.memory_space<vmem>>, vector<16x32xbf16>
    tpu.vector_store %arg4[%c0_8, %c0_9], %16 {strides = array<i32>} : memref<16x32xbf16, #tpu.memory_space<vmem>>, vector<16x32xbf16>,
    return
  }
  func.func @transform_0(%arg0: i32) -> (i32, i32) {
    %c0_i32 = arith.constant 0 : i32
    %c0_i32_0 = arith.constant 0 : i32
    return %arg0, %c0_i32 : i32, i32
  }
  func.func @transform_1(%arg0: i32) -> (i32, i32) {
    %c0_i32 = arith.constant 0 : i32
    %c0_i32_0 = arith.constant 0 : i32
    %c0_i32_1 = arith.constant 0 : i32
    return %c0_i32, %c0_i32_0 : i32, i32
  }
  func.func @transform_2(%arg0: i32) -> (i32, i32) {
    %c0_i32 = arith.constant 0 : i32
    %c0_i32_0 = arith.constant 0 : i32
    %c0_i32_1 = arith.constant 0 : i32
    return %c0_i32, %c0_i32_0 : i32, i32
  }
  func.func @transform_3(%arg0: i32) -> (i32, i32) {
    %c0_i32 = arith.constant 0 : i32
    %c0_i32_0 = arith.constant 0 : i32
    return %arg0, %c0_i32 : i32, i32
  }
}

module attributes {stable_mosaic.version = 11 : i64} {
  func.func @_classify_kernel(%arg0: i32, %arg1: i32, %arg2: memref<16x32xbf16, #tpu.memory_space<vmem>>, %arg3: memref<32x128xbf16, #tpu.memory_space<vmem>>, %arg4: memref<16x128xbf16, #tpu.memory_space<vmem>>) attributes {dimension_semantics = [#tpu.dimension_semantics<parallel>, #tpu.dimension_semantics<parallel>], iteration_bounds = array<i64: 1, 1>, scalar_prefetch = 0 : i64, scratch_operands = 0 : i64, tpu.core_type = #tpu.core_type<tc>, window_params = [{transform_indices = @transform_0, window_bounds = array<i64: 16, 32>}, {transform_indices = @transform_1, window_bounds = array<i64: 32, 128>}, {transform_indices = @transform_2, window_bounds = array<i64: 16, 128>}]} {
    %c0 = arith.constant 0 : index
    %c0_0 = arith.constant 0 : index
    %0 = vector.load %arg2[%c0, %c0_0] : memref<16x32xbf16, #tpu.memory_space<vmem>>, vector<16x32xbf16>
    %c0_1 = arith.constant 0 : index
    %c0_2 = arith.constant 0 : index
    %1 = vector.load %arg3[%c0_1, %c0_2] : memref<32x128xbf16, #tpu.memory_space<vmem>>, vector<32x128xbf16>
    %cst = arith.constant dense<0.000000e+00> : vector<16x128xf32>
    %2 = tpu.matmul %0, %1, %cst {dimension_numbers = #tpu.dot_dimension_numbers<[1], [0], [0], [1], [0, 0, 1, 1], [], []>} : vector<16x32xbf16>, vector<32x128xbf16>, vector<16x128xf32> -> vector<16x128xf32>
    %3 = arith.truncf %2 : vector<16x128xf32> to vector<16x128xbf16>
    %c0_3 = arith.constant 0 : index
    %c0_4 = arith.constant 0 : index
    %4 = vector.load %arg4[%c0_3, %c0_4] : memref<16x128xbf16, #tpu.memory_space<vmem>>, vector<16x128xbf16>
    tpu.vector_store %arg4[%c0_3, %c0_4], %3 {strides = array<i32>} : memref<16x128xbf16, #tpu.memory_space<vmem>>, vector<16x128xbf16>,
    return
  }
  func.func @transform_0(%arg0: i32, %arg1: i32) -> (i32, i32) {
    %c0_i32 = arith.constant 0 : i32
    %c0_i32_0 = arith.constant 0 : i32
    return %arg0, %c0_i32 : i32, i32
  }
  func.func @transform_1(%arg0: i32, %arg1: i32) -> (i32, i32) {
    %c0_i32 = arith.constant 0 : i32
    %c0_i32_0 = arith.constant 0 : i32
    return %c0_i32, %arg1 : i32, i32
  }
  func.func @transform_2(%arg0: i32, %arg1: i32) -> (i32, i32) {
    %c0_i32 = arith.constant 0 : i32
    return %arg0, %arg1 : i32, i32
  }
}

</mosaic_0001>

<llo_original>
// kernel: zero_shot_classifier_fwd.3
$region0: #{zero_shot_classifier_fwd.3}
  #allocation0 [shape = 'u32[]', space=smem, size = 0x4, offset = 0x4, fixed_abs, tag = 'smem constant byte address 0x4 - core index']
  #allocation1 [shape = 'u32[144,128]{1,0:T(1,128)}', space=vmem, size = 0x12000, scoped, tag = 'internal scratch']
  %s0 = inlined_call_operand.vmem [shape: bf16[16,32], index: 0, kind: input, shape index: {}]
  %s1 = inlined_call_operand.vmem [shape: bf16[32,128], index: 1, kind: input, shape index: {}]
  %s2 = inlined_call_operand.hbm [shape: bf16[16,128], index: 2, kind: output, shape index: {}]
  %s3 = sld [smem:[#allocation0]]
  $region18: #{zero_shot_classifier_fwd.3} parent=0
    _
  %s5 = ssub.s32 1, %s3
  %s6 = scalar_select 0, %s5, %s3
  $region1: #{zero_shot_classifier_fwd.3} parent=0
    #allocation2 [shape = 'u8[4096]{0}', space=vmem, size = 0x1000, scoped, tag = 'output window, operand 0, single buffered']
    #allocation3 [shape = 's32[1]{0}', space=sflag, size = 0x4, scoped, tag = 'scoped memory for zero_shot_classifier_fwd.3']
    %7 = vsyncpa [#allocation3], 0
    // Predicated region
    $region2: #{zero_shot_classifier_fwd.3} parent=1 // pred_check
      _
    $region3: #{zero_shot_classifier_fwd.3} parent=1 // pred_check_branch
      %9 = sbr.rel (0) target = $region5
    $region4: #{zero_shot_classifier_fwd.3} parent=1 // pred_region
      _
    $region5: #{zero_shot_classifier_fwd.3} parent=1 // pred_fallthru
      _
    // Predicated region
    $region6: #{zero_shot_classifier_fwd.3} parent=1 // pred_check
      _
    $region7: #{zero_shot_classifier_fwd.3} parent=1 // pred_check_branch
      %11 = sbr.rel (0) target = $region9
    $region8: #{zero_shot_classifier_fwd.3} parent=1 // pred_region
      _
    $region9: #{zero_shot_classifier_fwd.3} parent=1 // pred_fallthru
      _
    %v13 = vld [vmem:[%s0] sm:$0xf]
    %v14 = vld [vmem:[%s0 + $0x4] sm:$0xf]
    %v15 = vld [vmem:[%s1] sm:$0xf]
    %v16 = vld [vmem:[%s1 + $0x4] sm:$0xf]
    %v17 = vld [vmem:[%s1 + $0x8] sm:$0xf]
    %v18 = vld [vmem:[%s1 + $0xc] sm:$0xf]
    %v21 = vunpack.c.l.b16 %v13
    %v22 = vunpack.c.l.b16 %v14
    %v23 = vpack.c.b16 %v22, %v21
    %v28 = vunpack.c.l.b16 %v15
    %v29 = vunpack.c.l.b16 %v16
    %v30 = vunpack.c.l.b16 %v17
    %v31 = vunpack.c.l.b16 %v18
    %v32 = vpack.c.b16 %v29, %v28
    %v33 = vpack.c.b16 %v31, %v30
    %vm36 = vcmask 261120
    %v38 = vsel %vm36, %v23, 0
    %40 = vmatprep.subr.bf16.mxu0 0
    %41 = vmatpush1.bf16.msra.mxu0 0
    %42 = vmatprep.subr.bf16.mxu0 0
    %43 = vmatpush1.bf16.msra.mxu0 0
    %44 = vmatprep.subr.bf16.mxu0 0
    %45 = vmatpush1.bf16.msra.mxu0 0
    %46 = vmatprep.subr.bf16.mxu0 0
    %47 = vmatpush1.bf16.msra.mxu0 0
    %48 = vmatprep.subr.bf16.mxu0 0
    %49 = vmatpush1.bf16.msra.mxu0 0
    %50 = vmatprep.subr.bf16.mxu0 0
    %51 = vmatpush1.bf16.msra.mxu0 0
    %52 = vmatprep.subr.bf16.mxu0 0
    %53 = vmatpush1.bf16.msra.mxu0 %v33
    %54 = vmatprep.subr.bf16.mxu0 0
    %55 = vmatpush1.bf16.msra.mxu0 %v32
    %56 = vmatprep.subr.bf16.mxu0 0
    %57 = vmatpush2.bf16.msra.mxu0 0
    %58 = vmatprep.subr.bf16.mxu0 0
    %59 = vmatpush2.bf16.msra.mxu0 0
    %60 = vmatprep.subr.bf16.mxu0 0
    %61 = vmatpush2.bf16.msra.mxu0 0
    %62 = vmatprep.subr.bf16.mxu0 0
    %63 = vmatpush2.bf16.msra.mxu0 0
    %64 = vmatprep.subr.bf16.mxu0 0
    %65 = vmatpush2.bf16.msra.mxu0 0
    %66 = vmatprep.subr.bf16.mxu0 0
    %67 = vmatpush2.bf16.msra.mxu0 0
    %68 = vmatprep.subr.bf16.mxu0 0
    %69 = vmatpush2.bf16.msra.mxu0 0
    %70 = vmatprep.subr.bf16.mxu0 0
    %71 = vmatpush2.bf16.msra.mxu0 0
    %72 = vmatprep.mubr.bf16.mxu0 0
    %73 = vmatmul.mubr.bf16.gmra.mxu0 %v38
    %v74 = vpop.f32.mrf.mxu0
    %v75 = vadd.f32 0.0, %v74
    %v76 = vpop.f32.mrf.mxu0
    %v77 = vpop.f32.mrf.mxu0
    %v78 = vadd.f32 0.0, %v77
    %v79 = vpop.f32.mrf.mxu0
    %80 = vdwg.mxu0
    %v81 = vpack.c.bf16 %v78, %v75
    %v83 = vunpack.c.l.b16 %v81
    %v84 = vunpack.c.h.b16 %v81
    %v85 = vpack.c.b16 %v83, %v83
    %v86 = vpack.c.b16 %v84, %v84
    %89 = vst [vmem:[#allocation2] sm:$0xf] %v85
    %90 = vst [vmem:[#allocation2 + $0x4] sm:$0xf] %v86
    // Predicated region
    $region10: #{zero_shot_classifier_fwd.3} parent=1 // pred_check
      _
    $region11: #{zero_shot_classifier_fwd.3} parent=1 // pred_check_branch
      %92 = sbr.rel (0) target = $region13
    $region12: #{zero_shot_classifier_fwd.3} parent=1 // pred_region
      %s94 = ssub.s32 128, 128
      %95 = vsyncadd [#allocation3], %s94
      %s96 = sshll.u32 [#allocation2], 4
      %s97 = int_to_ptr.vmem [resolvable:$true] %s96
      %102 = dma.vmem_to_hbm [thread:$0]  %s97, 128, %s2, [#allocation3], 64, 64, 4
    $region13: #{zero_shot_classifier_fwd.3} parent=1 // pred_fallthru
      _
    // Predicated region
    $region14: #{zero_shot_classifier_fwd.3} parent=1 // pred_check
      _
    $region15: #{zero_shot_classifier_fwd.3} parent=1 // pred_check_branch
      %104 = sbr.rel (0) target = $region17
    $region16: #{zero_shot_classifier_fwd.3} parent=1 // pred_region
      %105 = dma.done [#allocation3], 128
    $region17: #{zero_shot_classifier_fwd.3} parent=1 // pred_fallthru
      _
    %106 = vsyncpa [#allocation3], 1

// kernel: zero_shot_classifier_fwd.2
$region0: #{zero_shot_classifier_fwd.2}
  #allocation0 [shape = 'u32[]', space=smem, size = 0x4, offset = 0x4, fixed_abs, tag = 'smem constant byte address 0x4 - core index']
  #allocation1 [shape = 'u32[144,128]{1,0:T(1,128)}', space=vmem, size = 0x12000, scoped, tag = 'internal scratch']
  %s0 = inlined_call_operand.vmem [shape: bf16[16,64], index: 0, kind: input, shape index: {}]
  %s1 = inlined_call_operand.vmem [shape: bf16[64,32], index: 1, kind: input, shape index: {}]
  %s2 = inlined_call_operand.vmem [shape: f32[1,32], index: 2, kind: input, shape index: {}]
  %s3 = inlined_call_operand.vmem [shape: bf16[16,32], index: 3, kind: output, shape index: {}]
  %s4 = sld [smem:[#allocation0]]
  $region22: #{zero_shot_classifier_fwd.2} parent=0
    _
  %s6 = ssub.s32 1, %s4
  %s7 = scalar_select 0, %s6, %s4
  // Predicated region
  $region2: #{zero_shot_classifier_fwd.2} parent=0 // pred_check
    _
  $region3: #{zero_shot_classifier_fwd.2} parent=0 // pred_check_branch
    %9 = sbr.rel (0) target = $region5
  $region4: #{zero_shot_classifier_fwd.2} parent=0 // pred_region
    _
  $region5: #{zero_shot_classifier_fwd.2} parent=0 // pred_fallthru
    _
  // Predicated region
  $region6: #{zero_shot_classifier_fwd.2} parent=0 // pred_check
    _
  $region7: #{zero_shot_classifier_fwd.2} parent=0 // pred_check_branch
    %11 = sbr.rel (0) target = $region9
  $region8: #{zero_shot_classifier_fwd.2} parent=0 // pred_region
    _
  $region9: #{zero_shot_classifier_fwd.2} parent=0 // pred_fallthru
    _
  // Predicated region
  $region10: #{zero_shot_classifier_fwd.2} parent=0 // pred_check
    _
  $region11: #{zero_shot_classifier_fwd.2} parent=0 // pred_check_branch
    %13 = sbr.rel (0) target = $region13
  $region12: #{zero_shot_classifier_fwd.2} parent=0 // pred_region
    _
  $region13: #{zero_shot_classifier_fwd.2} parent=0 // pred_fallthru
    _
  %v15 = vld [vmem:[%s0] sm:$0xf]
  %v16 = vld [vmem:[%s0 + $0x4] sm:$0xf]
  %v17 = vld [vmem:[%s1] sm:$0xf]
  %v18 = vld [vmem:[%s1 + $0x4] sm:$0xf]
  %v19 = vld [vmem:[%s1 + $0x8] sm:$0xf]
  %v20 = vld [vmem:[%s1 + $0xc] sm:$0xf]
  %v21 = vld [vmem:[%s1 + $0x10] sm:$0xf]
  %v22 = vld [vmem:[%s1 + $0x14] sm:$0xf]
  %v23 = vld [vmem:[%s1 + $0x18] sm:$0xf]
  %v24 = vld [vmem:[%s1 + $0x1c] sm:$0xf]
  %v25 = vld [vmem:[%s2] sm:$0x1]
  %v27 = vlaneseq
  %v28 = vshrl.u32 %v27, 7
  %v29 = vsub.s32 0, %v28
  %v30 = vrot.slane %v25, %v29
  %v34 = vunpack.c.l.b16 %v15
  %v35 = vunpack.c.l.b16 %v16
  %v36 = vpack.c.b16 %v35, %v34
  %v45 = vunpack.c.l.b16 %v17
  %v46 = vunpack.c.l.b16 %v18
  %v47 = vunpack.c.l.b16 %v19
  %v48 = vunpack.c.l.b16 %v20
  %v49 = vunpack.c.l.b16 %v21
  %v50 = vunpack.c.l.b16 %v22
  %v51 = vunpack.c.l.b16 %v23
  %v52 = vunpack.c.l.b16 %v24
  %v53 = vpack.c.b16 %v46, %v45
  %v54 = vpack.c.b16 %v48, %v47
  %v55 = vpack.c.b16 %v50, %v49
  %v56 = vpack.c.b16 %v52, %v51
  %vm61 = vcmask 523264
  %v63 = vsel %vm61, %v36, 0
  %65 = vmatprep.subr.bf16.mxu0 0
  %66 = vmatpush1.bf16.msra.mxu0 0
  %67 = vmatprep.subr.bf16.mxu0 0
  %68 = vmatpush1.bf16.msra.mxu0 0
  %69 = vmatprep.subr.bf16.mxu0 0
  %70 = vmatpush1.bf16.msra.mxu0 0
  %71 = vmatprep.subr.bf16.mxu0 0
  %72 = vmatpush1.bf16.msra.mxu0 0
  %73 = vmatprep.subr.bf16.mxu0 0
  %74 = vmatpush1.bf16.msra.mxu0 %v56
  %75 = vmatprep.subr.bf16.mxu0 0
  %76 = vmatpush1.bf16.msra.mxu0 %v55
  %77 = vmatprep.subr.bf16.mxu0 0
  %78 = vmatpush1.bf16.msra.mxu0 %v54
  %79 = vmatprep.subr.bf16.mxu0 0
  %80 = vmatpush1.bf16.msra.mxu0 %v53
  %81 = vmatprep.subr.bf16.mxu0 0
  %82 = vmatpush2.bf16.msra.mxu0 0
  %83 = vmatprep.subr.bf16.mxu0 0
  %84 = vmatpush2.bf16.msra.mxu0 0
  %85 = vmatprep.subr.bf16.mxu0 0
  %86 = vmatpush2.bf16.msra.mxu0 0
  %87 = vmatprep.subr.bf16.mxu0 0
  %88 = vmatpush2.bf16.msra.mxu0 0
  %89 = vmatprep.subr.bf16.mxu0 0
  %90 = vmatpush2.bf16.msra.mxu0 0
  %91 = vmatprep.subr.bf16.mxu0 0
  %92 = vmatpush2.bf16.msra.mxu0 0
  %93 = vmatprep.subr.bf16.mxu0 0
  %94 = vmatpush2.bf16.msra.mxu0 0
  %95 = vmatprep.subr.bf16.mxu0 0
  %96 = vmatpush2.bf16.msra.mxu0 0
  %97 = vmatprep.mubr.bf16.mxu0 0
  %98 = vmatmul.mubr.bf16.gmra.mxu0 %v63
  %v99 = vpop.f32.mrf.mxu0
  %v100 = vadd.f32 %v30, %v99
  %v101 = vpop.f32.mrf.mxu0
  %v102 = vpop.f32.mrf.mxu0
  %v103 = vadd.f32 %v30, %v102
  %v104 = vpop.f32.mrf.mxu0
  %105 = vdwg.mxu0
  %v106 = vmul.f32 %v100, %v100
  %v107 = vmul.f32 %v103, %v103
  %vm108 = vcmask 261120
  %v109 = vsel %vm108, %v106, 0.0
  %110 = vadd.xlane.f32.xlu0 %v109
  %v111 = vpop.xlane.xlu0 %110
  %v112 = vsel %vm108, %v107, 0.0
  %113 = vadd.xlane.f32.xlu0 %v112
  %v114 = vpop.xlane.xlu0 %113
  %v115 = vmax.f32 %v111, 1e-24
  %v116 = vmax.f32 %v114, 1e-24
  %v117 = vrsqrt.pop %v115
  %v118 = vrsqrt.pop %v116
  %v119 = vmul.f32 %v117, 50.0
  %v120 = vmul.f32 %v118, 50.0
  %v121 = vmul.f32 %v119, %v100
  %v122 = vmul.f32 %v120, %v103
  %v123 = vpack.c.bf16 %v122, %v121
  %v125 = vunpack.c.l.b16 %v123
  %v126 = vunpack.c.h.b16 %v123
  %v127 = vpack.c.b16 %v125, %v125
  %v128 = vpack.c.b16 %v126, %v126
  %vm131 = vcmask 257024
  %132 = vst.msk [vmem:[%s3] sm:$0xf] %vm131, %v127
  %133 = vst.msk [vmem:[%s3 + $0x4] sm:$0xf] %vm131, %v128
  // Predicated region
  $region14: #{zero_shot_classifier_fwd.2} parent=0 // pred_check
    _
  $region15: #{zero_shot_classifier_fwd.2} parent=0 // pred_check_branch
    %135 = sbr.rel (0) target = $region17
  $region16: #{zero_shot_classifier_fwd.2} parent=0 // pred_region
    _
  $region17: #{zero_shot_classifier_fwd.2} parent=0 // pred_fallthru
    _
  // Predicated region
  $region18: #{zero_shot_classifier_fwd.2} parent=0 // pred_check
    _
  $region19: #{zero_shot_classifier_fwd.2} parent=0 // pred_check_branch
    %137 = sbr.rel (0) target = $region21
  $region20: #{zero_shot_classifier_fwd.2} parent=0 // pred_region
    _
  $region21: #{zero_shot_classifier_fwd.2} parent=0 // pred_fallthru
    _

</llo_original>
